<compile_context>
chip_gen: v5e
topology: v5e:2x2
jax: 0.10.0
libtpu: 0.0.40
codegen_flags: <defaults>
</compile_context>

<pallas_src>
import jax
import jax.numpy as jnp
from jax import lax
from jax.experimental import pallas as pl
from jax.experimental.pallas import tpu as pltpu

LN_EPS = 1e-5  # torch.nn.LayerNorm default


def _round_up(x, m):
    return ((x + m - 1) // m) * m


def _vmem_capacity_bytes():
    try:
        cap = int(pltpu.get_tpu_info().vmem_capacity_bytes)
        if cap > 0:
            return cap
    except Exception:
        pass
    return 64 << 20  # conservative fallback (v7x per-TC VMEM)


# ----------------------------------------------------------------------------
# Kernel
# ----------------------------------------------------------------------------
def residual_block_kernel(x_ref, gamma_ref, beta_ref,
                          w1_ref, b1_ref, w2_ref, b2_ref,
                          o_ref, y_scr, *acc_scratch):
    """One (batch_tile, 4H_tile) grid step.

    acc_scratch is empty when the output dtype is f32 (we accumulate directly
    into the VMEM-resident output block); otherwise it holds one f32 scratch.
    """
    acc_ref = acc_scratch[0] if acc_scratch else o_ref
    k = pl.program_id(1)

    # ---- first step of the 4H reduction: LayerNorm once per batch tile ------
    @pl.when(k == 0)
    def _():
        x = x_ref[...].astype(jnp.float32)                       # (TB, H)
        mean = jnp.mean(x, axis=-1, keepdims=True)
        cen = x - mean
        var = jnp.mean(cen * cen, axis=-1, keepdims=True)
        y = cen * lax.rsqrt(var + LN_EPS) * gamma_ref[...] + beta_ref[...]
        y_scr[...] = y.astype(y_scr.dtype)                       # bf16 for MXU

    # ---- Linear1 chunk + bias + ReLU (MXU, bf16 inputs / f32 accumulate) ----
    h = jnp.dot(y_scr[...], w1_ref[...],
                preferred_element_type=jnp.float32)              # (TB, TN4)
    h = jnp.maximum(h + b1_ref[...], 0.0)

    # ---- Linear2 chunk -------------------------------------------------------
    part = jnp.dot(h.astype(w2_ref.dtype), w2_ref[...],
                   preferred_element_type=jnp.float32)           # (TB, H)

    # ---- accumulate; bias2 + residual folded into the first partial ---------
    @pl.when(k == 0)
    def _():
        acc_ref[...] = (part + b2_ref[...]
                        + x_ref[...].astype(jnp.float32)).astype(acc_ref.dtype)

    @pl.when(k > 0)
    def _():
        acc_ref[...] = (acc_ref[...].astype(jnp.float32) + part).astype(acc_ref.dtype)

    # ---- epilogue only needed when accumulating in a separate scratch -------
    if acc_scratch:
        @pl.when(k == pl.num_programs(1) - 1)
        def _():
            o_ref[...] = acc_ref[...].astype(o_ref.dtype)


# ----------------------------------------------------------------------------
# Tile selection helpers
# ----------------------------------------------------------------------------
def _auto_tile_n4(H, H4, budget):
    """Pick the 4H tile.  Prefer n_k == 1 (weights fully VMEM-resident)."""
    w_full = 2 * (2 * H * H4) * 2          # w1 + w2, bf16, double-buffered
    weight_budget = budget // 2            # leave at least half for activations
    if w_full <= weight_budget:
        return H4                          # weights resident, loaded once
    if H4 % 128 != 0:
        # TODO(synk): non-128-multiple 4H with weights too big for VMEM would
        # need 4H padding; unrealistic for this module, so take the whole axis.
        return H4
    best = 128
    t = 128
    while t <= H4:
        if H4 % t == 0 and 2 * (2 * H * t) * 2 <= weight_budget:
            best = t
        t += 128
    return best


def _auto_tile_b(B, H, tile_n4, budget, x_itemsize, out_itemsize, use_acc,
                 desired):
    """Pick the batch tile: as large as fits, preferring a divisor of batch."""
    # per-batch-row VMEM bytes: x (2-buf) + out (2-buf) + LN cache (bf16)
    # + optional f32 accumulator + the (TB, TN4) Linear1 intermediate.
    per_row = (H * (2 * x_itemsize + 2 * out_itemsize + 2 + (4 if use_acc else 0))
               + 4 * tile_n4)
    fixed = 2 * (2 * H * tile_n4) * 2 + 2 * (tile_n4 + 3 * H) * 4
    fit = max(8, ((budget - fixed) // per_row // 8) * 8)

    B8 = _round_up(B, 8)
    desired = max(8, (min(desired, fit) // 8) * 8)
    if B8 <= desired:
        return B8
    # prefer a tile that divides the 8-padded batch (no wrapper pad copy);
    # only pad the batch when the best divisor would be too small to keep the
    # weight-reuse / per-grid-step-overhead win.
    best = 0
    d = 8
    while d <= desired:
        if B8 % d == 0:
            best = d
        d += 8
    if best >= max(128, desired // 2):
        return best
    return desired


# ----------------------------------------------------------------------------
# Wrapper
# ----------------------------------------------------------------------------
def residual_block(x, gamma, beta, w1, b1, w2, b2, *, tile_b=None, tile_n4=None):
    B, H = x.shape
    H4 = w1.shape[1]
    assert w1.shape == (H, H4) and w2.shape == (H4, H)
    assert b1.shape == (H4,) and b2.shape == (H,)

    out_dtype = x.dtype
    use_acc = jnp.dtype(out_dtype) != jnp.dtype(jnp.float32)
    x_itemsize = jnp.dtype(x.dtype).itemsize
    out_itemsize = jnp.dtype(out_dtype).itemsize

    # ---- generation-aware VMEM budget (headroom for Mosaic internal scratch)
    vmem_cap = _vmem_capacity_bytes()
    budget = int(vmem_cap * 0.85)          # ~54 MiB on v7x, ~108 MiB on v5e/v6e

    # ---- tile selection -------------------------------------------------------
    if tile_n4 is None or H4 % tile_n4 != 0 or \
            (tile_n4 != H4 and tile_n4 % 128 != 0):
        tile_n4 = _auto_tile_n4(H, H4, budget)

    if tile_b is None:
        # larger batch tiles raise arithmetic intensity (~tile_b FLOP per
        # weight byte); 128 MiB-VMEM chips (v5e/v6e) can go bigger than v7x.
        desired = 512 if vmem_cap > (64 << 20) else 384
        tile_b = _auto_tile_b(B, H, tile_n4, budget, x_itemsize, out_itemsize,
                              use_acc, desired)
    else:
        tile_b = max(8, (tile_b // 8) * 8)

    B_pad = _round_up(B, tile_b)
    n_b = B_pad // tile_b
    n_k = H4 // tile_n4

    # ---- pad batch only when tile selection could not avoid it ---------------
    if B_pad != B:
        x_in = jnp.zeros((B_pad, H), x.dtype).at[:B].set(x)
    else:
        x_in = x

    # ---- parameters in matmul-friendly shapes / dtypes -----------------------
    gamma2 = gamma.reshape(1, H).astype(jnp.float32)
    beta2 = beta.reshape(1, H).astype(jnp.float32)
    b1_2 = b1.reshape(1, H4).astype(jnp.float32)
    b2_2 = b2.reshape(1, H).astype(jnp.float32)
    w1_bf = w1.astype(jnp.bfloat16)
    w2_bf = w2.astype(jnp.bfloat16)

    # ---- VMEM limit / cost hints ----------------------------------------------
    vmem_est = (
        2 * tile_b * H * x_itemsize                  # x tile (double-buffered)
        + 2 * tile_b * H * out_itemsize              # output tile
        + tile_b * H * 2                             # LN cache (bf16)
        + (tile_b * H * 4 if use_acc else 0)         # f32 accumulator scratch
        + tile_b * tile_n4 * 4                       # Linear1 intermediate
        + 2 * (2 * H * tile_n4) * 2                  # bf16 w1/w2 tiles (2-buf)
        + 2 * (tile_n4 + 3 * H) * 4                  # b1, b2, gamma, beta
    )
    vmem_limit = min(max(int(vmem_est * 1.3) + (4 << 20), 32 << 20),
                     int(vmem_cap * 0.9))

    weight_bytes = 2 * H * H4 * 2                    # bf16 w1 + w2
    weight_reads = weight_bytes if n_k == 1 else n_b * weight_bytes
    cost = pl.CostEstimate(
        flops=4 * B_pad * H * H4,                    # two (B,H)x(H,4H)-sized matmuls
        transcendentals=B_pad,                       # one rsqrt per row
        bytes_accessed=(B_pad * H * (x_itemsize + out_itemsize)
                        + weight_reads
                        + (b1_2.size + b2_2.size + gamma2.size + beta2.size) * 4),
    )

    scratch = [pltpu.VMEM((tile_b, H), jnp.bfloat16)]   # cached LayerNorm output
    if use_acc:
        scratch.append(pltpu.VMEM((tile_b, H), jnp.float32))

    # NOTE: if profiling ever shows exposed DMA with small 4H tiles, add
    # pipeline_mode=pl.Buffered(3) to the w1/w2 BlockSpecs only.
    out = pl.pallas_call(
        residual_block_kernel,
        out_shape=jax.ShapeDtypeStruct((B_pad, H), out_dtype),
        grid_spec=pltpu.PrefetchScalarGridSpec(
            num_scalar_prefetch=0,
            grid=(n_b, n_k),
            in_specs=[
                pl.BlockSpec((tile_b, H),  lambda i, k: (i, 0)),   # x
                pl.BlockSpec((1, H),       lambda i, k: (0, 0)),   # gamma
                pl.BlockSpec((1, H),       lambda i, k: (0, 0)),   # beta
                pl.BlockSpec((H, tile_n4), lambda i, k: (0, k)),   # w1 (in, out)
                pl.BlockSpec((1, tile_n4), lambda i, k: (0, k)),   # b1
                pl.BlockSpec((tile_n4, H), lambda i, k: (k, 0)),   # w2 (in, out)
                pl.BlockSpec((1, H),       lambda i, k: (0, 0)),   # b2
            ],
            out_specs=pl.BlockSpec((tile_b, H), lambda i, k: (i, 0)),
            scratch_shapes=scratch,
        ),
        compiler_params=pltpu.CompilerParams(
            dimension_semantics=("parallel", "arbitrary"),
            vmem_limit_bytes=vmem_limit,
        ),
        cost_estimate=cost,
    )(x_in, gamma2, beta2, w1_bf, b1_2, w2_bf, b2_2)

    return out[:B] if B_pad != B else out


# ----------------------------------------------------------------------------
# Reference (mirrors the kernel's precision policy: bf16 matmuls, f32 accumulate)
# ----------------------------------------------------------------------------
def residual_block_ref(x, gamma, beta, w1, b1, w2, b2):
    xf = x.astype(jnp.float32)
    mean = jnp.mean(xf, axis=-1, keepdims=True)
    var = jnp.mean((xf - mean) ** 2, axis=-1, keepdims=True)
    y = (xf - mean) * lax.rsqrt(var + LN_EPS) * gamma.reshape(1, -1) + beta.reshape(1, -1)
    h = jnp.dot(y.astype(jnp.bfloat16), w1.astype(jnp.bfloat16),
                preferred_element_type=jnp.float32) + b1.reshape(1, -1)
    h = jnp.maximum(h, 0.0)
    out = jnp.dot(h.astype(jnp.bfloat16), w2.astype(jnp.bfloat16),
                  preferred_element_type=jnp.float32) + b2.reshape(1, -1)
    return (out + xf).astype(x.dtype)


if __name__ == "__main__":
    key = jax.random.PRNGKey(0)

    def make_params(k, H):
        H4 = 4 * H
        ks = jax.random.split(k, 6)
        gamma = 1.0 + 0.1 * jax.random.normal(ks[0], (H,), dtype=jnp.float32)
        beta = 0.1 * jax.random.normal(ks[1], (H,), dtype=jnp.float32)
        lim1 = 1.0 / jnp.sqrt(H)
        w1 = jax.random.uniform(ks[2], (H, H4), minval=-lim1, maxval=lim1,
                                dtype=jnp.float32)
        b1 = jax.random.uniform(ks[3], (H4,), minval=-lim1, maxval=lim1,
                                dtype=jnp.float32)
        lim2 = 1.0 / jnp.sqrt(H4)
        w2 = jax.random.uniform(ks[4], (H4, H), minval=-lim2, maxval=lim2,
                                dtype=jnp.float32)
        b2 = jax.random.uniform(ks[5], (H,), minval=-lim2, maxval=lim2,
                                dtype=jnp.float32)
        return gamma, beta, w1, b1, w2, b2

    kp1, kp2, kx1, kx2 = jax.random.split(key, 4)

    # ---- test 1: small shape, auto tiles (weights resident, ~1 grid step) ----
    B, H = 64, 128
    params = make_params(kp1, H)
    x = jax.random.normal(kx1, (B, H), dtype=jnp.float32)
    out = jax.block_until_ready(residual_block(x, *params))
    ref = residual_block_ref(x, *params)
    err = jnp.max(jnp.abs(out - ref))
    assert out.shape == (B, H)
    assert jnp.allclose(out, ref, atol=2e-3, rtol=2e-3), f"test1 max|err|={err}"

    # ---- test 2: ragged batch + tiled 4H reduction (exercises k-accumulation)
    B, H = 100, 64
    params = make_params(kp2, H)
    x = jax.random.normal(kx2, (B, H), dtype=jnp.float32)
    out = jax.block_until_ready(
        residual_block(x, *params, tile_b=8, tile_n4=128))
    ref = residual_block_ref(x, *params)
    err = jnp.max(jnp.abs(out - ref))
    assert out.shape == (B, H)
    assert jnp.allclose(out, ref, atol=2e-3, rtol=2e-3), f"test2 max|err|={err}"

    print("KERNEL_OK")
</pallas_src>

<mosaic_0001>
module attributes {stable_mosaic.version = 11 : i64} {
  func.func @residual_block_kernel(%arg0: i32, %arg1: i32, %arg2: memref<64x128xf32, #tpu.memory_space<vmem>>, %arg3: memref<1x128xf32, #tpu.memory_space<vmem>>, %arg4: memref<1x128xf32, #tpu.memory_space<vmem>>, %arg5: memref<128x512xbf16, #tpu.memory_space<vmem>>, %arg6: memref<1x512xf32, #tpu.memory_space<vmem>>, %arg7: memref<512x128xbf16, #tpu.memory_space<vmem>>, %arg8: memref<1x128xf32, #tpu.memory_space<vmem>>, %arg9: memref<64x128xf32, #tpu.memory_space<vmem>>, %arg10: memref<64x128xbf16, #tpu.memory_space<vmem>>) attributes {dimension_semantics = [#tpu.dimension_semantics<parallel>, #tpu.dimension_semantics<arbitrary>], iteration_bounds = array<i64: 1, 1>, scalar_prefetch = 0 : i64, scratch_operands = 1 : i64, tpu.core_type = #tpu.core_type<tc>, window_params = [{transform_indices = @transform_0, window_bounds = array<i64: 64, 128>}, {pipeline_mode = #tpu.pipeline_mode<synchronous>, transform_indices = @transform_1, window_bounds = array<i64: 1, 128>}, {pipeline_mode = #tpu.pipeline_mode<synchronous>, transform_indices = @transform_2, window_bounds = array<i64: 1, 128>}, {transform_indices = @transform_3, window_bounds = array<i64: 128, 512>}, {transform_indices = @transform_4, window_bounds = array<i64: 1, 512>}, {transform_indices = @transform_5, window_bounds = array<i64: 512, 128>}, {pipeline_mode = #tpu.pipeline_mode<synchronous>, transform_indices = @transform_6, window_bounds = array<i64: 1, 128>}, {transform_indices = @transform_7, window_bounds = array<i64: 64, 128>}]} {
    %c0_i32 = arith.constant 0 : i32
    %0 = arith.cmpi eq, %arg1, %c0_i32 : i32
    %1 = arith.extui %0 : i1 to i32
    %c0_i32_0 = arith.constant 0 : i32
    %2 = arith.cmpi ne, %1, %c0_i32_0 : i32
    scf.if %2 {
      %c0_14 = arith.constant 0 : index
      %c0_15 = arith.constant 0 : index
      %20 = vector.load %arg2[%c0_14, %c0_15] : memref<64x128xf32, #tpu.memory_space<vmem>>, vector<64x128xf32>
      %cst_16 = arith.constant dense<0.000000e+00> : vector<64xf32>
      %21 = vector.multi_reduction <add>, %20, %cst_16 [1] : vector<64x128xf32> to vector<64xf32>
      %22 = vector.shape_cast %21 : vector<64xf32> to vector<64x1xf32>
      %cst_17 = arith.constant 1.280000e+02 : f32
      %23 = vector.broadcast %cst_17 : f32 to vector<64x1xf32>
      %24 = arith.divf %22, %23 : vector<64x1xf32>
      %25 = vector.broadcast %24 : vector<64x1xf32> to vector<64x128xf32>
      %26 = arith.subf %20, %25 : vector<64x128xf32>
      %27 = arith.mulf %26, %26 : vector<64x128xf32>
      %cst_18 = arith.constant dense<0.000000e+00> : vector<64xf32>
      %28 = vector.multi_reduction <add>, %27, %cst_18 [1] : vector<64x128xf32> to vector<64xf32>
      %29 = vector.shape_cast %28 : vector<64xf32> to vector<64x1xf32>
      %cst_19 = arith.constant 1.280000e+02 : f32
      %30 = vector.broadcast %cst_19 : f32 to vector<64x1xf32>
      %31 = arith.divf %29, %30 : vector<64x1xf32>
      %cst_20 = arith.constant 9.99999974E-6 : f32
      %32 = vector.broadcast %cst_20 : f32 to vector<64x1xf32>
      %33 = arith.addf %31, %32 : vector<64x1xf32>
      %34 = math.rsqrt %33 : vector<64x1xf32>
      %35 = vector.broadcast %34 : vector<64x1xf32> to vector<64x128xf32>
      %36 = arith.mulf %26, %35 : vector<64x128xf32>
      %c0_21 = arith.constant 0 : index
      %c0_22 = arith.constant 0 : index
      %37 = vector.load %arg3[%c0_21, %c0_22] : memref<1x128xf32, #tpu.memory_space<vmem>>, vector<1x128xf32>
      %38 = vector.broadcast %37 : vector<1x128xf32> to vector<64x128xf32>
      %39 = arith.mulf %36, %38 : vector<64x128xf32>
      %c0_23 = arith.constant 0 : index
      %c0_24 = arith.constant 0 : index
      %40 = vector.load %arg4[%c0_23, %c0_24] : memref<1x128xf32, #tpu.memory_space<vmem>>, vector<1x128xf32>
      %41 = vector.broadcast %40 : vector<1x128xf32> to vector<64x128xf32>
      %42 = arith.addf %39, %41 : vector<64x128xf32>
      %43 = arith.truncf %42 : vector<64x128xf32> to vector<64x128xbf16>
      %c0_25 = arith.constant 0 : index
      %c0_26 = arith.constant 0 : index
      %44 = vector.load %arg10[%c0_25, %c0_26] : memref<64x128xbf16, #tpu.memory_space<vmem>>, vector<64x128xbf16>
      tpu.vector_store %arg10[%c0_25, %c0_26], %43 {strides = array<i32>} : memref<64x128xbf16, #tpu.memory_space<vmem>>, vector<64x128xbf16>,
    } else {
    }
    %c0 = arith.constant 0 : index
    %c0_1 = arith.constant 0 : index
    %3 = vector.load %arg10[%c0, %c0_1] : memref<64x128xbf16, #tpu.memory_space<vmem>>, vector<64x128xbf16>
    %c0_2 = arith.constant 0 : index
    %c0_3 = arith.constant 0 : index
    %4 = vector.load %arg5[%c0_2, %c0_3] : memref<128x512xbf16, #tpu.memory_space<vmem>>, vector<128x512xbf16>
    %cst = arith.constant dense<0.000000e+00> : vector<64x512xf32>
    %5 = tpu.matmul %3, %4, %cst {dimension_numbers = #tpu.dot_dimension_numbers<[1], [0], [0], [1], [0, 0, 1, 1], [], []>} : vector<64x128xbf16>, vector<128x512xbf16>, vector<64x512xf32> -> vector<64x512xf32>
    %c0_4 = arith.constant 0 : index
    %c0_5 = arith.constant 0 : index
    %6 = vector.load %arg6[%c0_4, %c0_5] : memref<1x512xf32, #tpu.memory_space<vmem>>, vector<1x512xf32>
    %7 = vector.broadcast %6 : vector<1x512xf32> to vector<64x512xf32>
    %8 = arith.addf %5, %7 : vector<64x512xf32>
    %cst_6 = arith.constant 0.000000e+00 : f32
    %9 = vector.broadcast %cst_6 : f32 to vector<64x512xf32>
    %10 = arith.maximumf %8, %9 : vector<64x512xf32>
    %11 = arith.truncf %10 : vector<64x512xf32> to vector<64x512xbf16>
    %c0_7 = arith.constant 0 : index
    %c0_8 = arith.constant 0 : index
    %12 = vector.load %arg7[%c0_7, %c0_8] : memref<512x128xbf16, #tpu.memory_space<vmem>>, vector<512x128xbf16>
    %cst_9 = arith.constant dense<0.000000e+00> : vector<64x128xf32>
    %13 = tpu.matmul %11, %12, %cst_9 {dimension_numbers = #tpu.dot_dimension_numbers<[1], [0], [0], [1], [0, 0, 1, 1], [], []>} : vector<64x512xbf16>, vector<512x128xbf16>, vector<64x128xf32> -> vector<64x128xf32>
    %c0_i32_10 = arith.constant 0 : i32
    %14 = arith.cmpi eq, %arg1, %c0_i32_10 : i32
    %15 = arith.extui %14 : i1 to i32
    %c0_i32_11 = arith.constant 0 : i32
    %16 = arith.cmpi ne, %15, %c0_i32_11 : i32
    scf.if %16 {
      %c0_14 = arith.constant 0 : index
      %c0_15 = arith.constant 0 : index
      %20 = vector.load %arg8[%c0_14, %c0_15] : memref<1x128xf32, #tpu.memory_space<vmem>>, vector<1x128xf32>
      %21 = vector.broadcast %20 : vector<1x128xf32> to vector<64x128xf32>
      %22 = arith.addf %13, %21 : vector<64x128xf32>
      %c0_16 = arith.constant 0 : index
      %c0_17 = arith.constant 0 : index
      %23 = vector.load %arg2[%c0_16, %c0_17] : memref<64x128xf32, #tpu.memory_space<vmem>>, vector<64x128xf32>
      %24 = arith.addf %22, %23 : vector<64x128xf32>
      %c0_18 = arith.constant 0 : index
      %c0_19 = arith.constant 0 : index
      %25 = vector.load %arg9[%c0_18, %c0_19] : memref<64x128xf32, #tpu.memory_space<vmem>>, vector<64x128xf32>
      tpu.vector_store %arg9[%c0_18, %c0_19], %24 {strides = array<i32>} : memref<64x128xf32, #tpu.memory_space<vmem>>, vector<64x128xf32>,
    } else {
    }
    %c0_i32_12 = arith.constant 0 : i32
    %17 = arith.cmpi sgt, %arg1, %c0_i32_12 : i32
    %18 = arith.extui %17 : i1 to i32
    %c0_i32_13 = arith.constant 0 : i32
    %19 = arith.cmpi ne, %18, %c0_i32_13 : i32
    scf.if %19 {
      %c0_14 = arith.constant 0 : index
      %c0_15 = arith.constant 0 : index
      %20 = vector.load %arg9[%c0_14, %c0_15] : memref<64x128xf32, #tpu.memory_space<vmem>>, vector<64x128xf32>
      %21 = arith.addf %20, %13 : vector<64x128xf32>
      %c0_16 = arith.constant 0 : index
      %c0_17 = arith.constant 0 : index
      %22 = vector.load %arg9[%c0_16, %c0_17] : memref<64x128xf32, #tpu.memory_space<vmem>>, vector<64x128xf32>
      tpu.vector_store %arg9[%c0_16, %c0_17], %21 {strides = array<i32>} : memref<64x128xf32, #tpu.memory_space<vmem>>, vector<64x128xf32>,
    } else {
    }
    return
  }
  func.func @transform_0(%arg0: i32, %arg1: i32) -> (i32, i32) {
    %c0_i32 = arith.constant 0 : i32
    %c0_i32_0 = arith.constant 0 : i32
    return %arg0, %c0_i32 : i32, i32
  }
  func.func @transform_1(%arg0: i32, %arg1: i32) -> (i32, i32) {
    %c0_i32 = arith.constant 0 : i32
    %c0_i32_0 = arith.constant 0 : i32
    %c0_i32_1 = arith.constant 0 : i32
    return %c0_i32, %c0_i32_0 : i32, i32
  }
  func.func @transform_2(%arg0: i32, %arg1: i32) -> (i32, i32) {
    %c0_i32 = arith.constant 0 : i32
    %c0_i32_0 = arith.constant 0 : i32
    %c0_i32_1 = arith.constant 0 : i32
    return %c0_i32, %c0_i32_0 : i32, i32
  }
  func.func @transform_3(%arg0: i32, %arg1: i32) -> (i32, i32) {
    %c0_i32 = arith.constant 0 : i32
    %c0_i32_0 = arith.constant 0 : i32
    return %c0_i32, %arg1 : i32, i32
  }
  func.func @transform_4(%arg0: i32, %arg1: i32) -> (i32, i32) {
    %c0_i32 = arith.constant 0 : i32
    %c0_i32_0 = arith.constant 0 : i32
    return %c0_i32, %arg1 : i32, i32
  }
  func.func @transform_5(%arg0: i32, %arg1: i32) -> (i32, i32) {
    %c0_i32 = arith.constant 0 : i32
    %c0_i32_0 = arith.constant 0 : i32
    return %arg1, %c0_i32 : i32, i32
  }
  func.func @transform_6(%arg0: i32, %arg1: i32) -> (i32, i32) {
    %c0_i32 = arith.constant 0 : i32
    %c0_i32_0 = arith.constant 0 : i32
    %c0_i32_1 = arith.constant 0 : i32
    return %c0_i32, %c0_i32_0 : i32, i32
  }
  func.func @transform_7(%arg0: i32, %arg1: i32) -> (i32, i32) {
    %c0_i32 = arith.constant 0 : i32
    %c0_i32_0 = arith.constant 0 : i32
    return %arg0, %c0_i32 : i32, i32
  }
}

</mosaic_0001>

<llo_original>
// kernel: tpu_custom_call.1
$region0: #{tpu_custom_call.1}
  #allocation0 [shape = 'u32[]', space=smem, size = 0x4, offset = 0x4, fixed_abs, tag = 'smem constant byte address 0x4 - core index']
  #allocation1 [shape = 'u32[72,128]{1,0:T(1,128)}', space=vmem, size = 0x9000, scoped, tag = 'internal scratch']
  #allocation2 [shape = 'bf16[64,128]{1,0:T(8,128)(2,1)}', space=vmem, size = 0x4000, scoped, tag = 'scratch operand']
  %s0 = inlined_call_operand.hbm [shape: f32[64,128], index: 0, kind: input, shape index: {}]
  %s1 = inlined_call_operand.hbm [shape: f32[1,128], index: 1, kind: input, shape index: {}]
  %s2 = inlined_call_operand.vmem [shape: f32[1,128], index: 2, kind: input, shape index: {}]
  %s3 = inlined_call_operand.hbm [shape: bf16[128,512], index: 3, kind: input, shape index: {}]
  %s4 = inlined_call_operand.hbm [shape: f32[1,512], index: 4, kind: input, shape index: {}]
  %s5 = inlined_call_operand.hbm [shape: bf16[512,128], index: 5, kind: input, shape index: {}]
  %s6 = inlined_call_operand.vmem [shape: f32[1,128], index: 6, kind: input, shape index: {}]
  %s7 = inlined_call_operand.hbm [shape: f32[64,128], index: 7, kind: output, shape index: {}]
  %s8 = sld [smem:[#allocation0]]
  $region70: #{tpu_custom_call.1} parent=0
    _
  %s10 = ssub.s32 1, %s8
  %s11 = scalar_select 0, %s10, %s8
  $region1: #{tpu_custom_call.1} parent=0
    #allocation3 [shape = 'u8[32768]{0}', space=vmem, size = 0x8000, scoped, tag = 'input window, operand 0, single buffered']
    #allocation4 [shape = 's32[1]{0}', space=sflag, size = 0x4, scoped, tag = 'scoped memory for tpu_custom_call.1']
    #allocation5 [shape = 's32[1]{0}', space=sflag, size = 0x4, scoped, tag = 'scoped memory for tpu_custom_call.1']
    #allocation6 [shape = 'u8[512]{0}', space=vmem, size = 0x400, scoped, tag = 'input window, operand 1, single buffered']
    #allocation7 [shape = 's32[1]{0}', space=sflag, size = 0x4, scoped, tag = 'scoped memory for tpu_custom_call.1']
    #allocation8 [shape = 'u8[131072]{0}', space=vmem, size = 0x20000, scoped, tag = 'input window, operand 3, single buffered']
    #allocation9 [shape = 'u8[2048]{0}', space=vmem, size = 0x800, scoped, tag = 'input window, operand 4, single buffered']
    #allocation10 [shape = 's32[1]{0}', space=sflag, size = 0x4, scoped, tag = 'scoped memory for tpu_custom_call.1']
    #allocation11 [shape = 'u8[131072]{0}', space=vmem, size = 0x20000, scoped, tag = 'input window, operand 5, single buffered']
    #allocation12 [shape = 'u8[32768]{0}', space=vmem, size = 0x8000, scoped, tag = 'output window, operand 0, single buffered']
    %12 = vsyncpa [#allocation4], 0
    %13 = vsyncpa [#allocation7], 0
    %14 = vsyncpa [#allocation10], 0
    %15 = vsyncpa [#allocation5], 0
    // Predicated region
    $region2: #{tpu_custom_call.1} parent=1 // pred_check
      _
    $region3: #{tpu_custom_call.1} parent=1 // pred_check_branch
      %17 = sbr.rel (0) target = $region5
    $region4: #{tpu_custom_call.1} parent=1 // pred_region
      %19 = vsyncadd [#allocation4], 0
      %s20 = sshll.u32 %s0, 4
      %s21 = int_to_ptr.hbm [resolvable:$true] %s20
      %s22 = sshll.u32 [#allocation3], 4
      %s23 = int_to_ptr.vmem [resolvable:$true] %s22
      %28 = dma.hbm_to_vmem [thread:$0]  %s21, 1024, %s23, [#allocation4], 128, 128, 8
    $region5: #{tpu_custom_call.1} parent=1 // pred_fallthru
      _
    // Predicated region
    $region6: #{tpu_custom_call.1} parent=1 // pred_check
      _
    $region7: #{tpu_custom_call.1} parent=1 // pred_check_branch
      %30 = sbr.rel (0) target = $region9
    $region8: #{tpu_custom_call.1} parent=1 // pred_region
      %32 = vsyncadd [#allocation7], 0
      %s34 = sshll.u32 %s1, 4
      %s35 = int_to_ptr.hbm [resolvable:$true] %s34
      %s36 = sshll.u32 [#allocation6], 4
      %s37 = int_to_ptr.vmem [resolvable:$true] %s36
      %39 = dma.hbm_to_vmem [thread:$0]  %s35, 16, %s37, [#allocation7]
    $region9: #{tpu_custom_call.1} parent=1 // pred_fallthru
      _
    // Predicated region
    $region10: #{tpu_custom_call.1} parent=1 // pred_check
      _
    $region11: #{tpu_custom_call.1} parent=1 // pred_check_branch
      %41 = sbr.rel (0) target = $region13
    $region12: #{tpu_custom_call.1} parent=1 // pred_region
      _
    $region13: #{tpu_custom_call.1} parent=1 // pred_fallthru
      _
    // Predicated region
    $region14: #{tpu_custom_call.1} parent=1 // pred_check
      _
    $region15: #{tpu_custom_call.1} parent=1 // pred_check_branch
      %43 = sbr.rel (0) target = $region17
    $region16: #{tpu_custom_call.1} parent=1 // pred_region
      %45 = vsyncadd [#allocation7], 0
      %s46 = sshll.u32 %s3, 4
      %s47 = int_to_ptr.hbm [resolvable:$true] %s46
      %s48 = sshll.u32 [#allocation8], 4
      %s49 = int_to_ptr.vmem [resolvable:$true] %s48
      %54 = dma.hbm_to_vmem [thread:$0]  %s47, 4096, %s49, [#allocation7], 256, 256, 16
    $region17: #{tpu_custom_call.1} parent=1 // pred_fallthru
      _
    // Predicated region
    $region18: #{tpu_custom_call.1} parent=1 // pred_check
      _
    $region19: #{tpu_custom_call.1} parent=1 // pred_check_branch
      %56 = sbr.rel (0) target = $region21
    $region20: #{tpu_custom_call.1} parent=1 // pred_region
      %58 = vsyncadd [#allocation10], 0
      %s60 = sshll.u32 %s4, 4
      %s61 = int_to_ptr.hbm [resolvable:$true] %s60
      %s62 = sshll.u32 [#allocation9], 4
      %s63 = int_to_ptr.vmem [resolvable:$true] %s62
      %65 = dma.hbm_to_vmem [thread:$0]  %s61, 64, %s63, [#allocation10]
    $region21: #{tpu_custom_call.1} parent=1 // pred_fallthru
      _
    // Predicated region
    $region22: #{tpu_custom_call.1} parent=1 // pred_check
      _
    $region23: #{tpu_custom_call.1} parent=1 // pred_check_branch
      %67 = sbr.rel (0) target = $region25
    $region24: #{tpu_custom_call.1} parent=1 // pred_region
      %69 = vsyncadd [#allocation10], 0
      %s70 = sshll.u32 %s5, 4
      %s71 = int_to_ptr.hbm [resolvable:$true] %s70
      %s72 = sshll.u32 [#allocation11], 4
      %s73 = int_to_ptr.vmem [resolvable:$true] %s72
      %78 = dma.hbm_to_vmem [thread:$0]  %s71, 4096, %s73, [#allocation10], 64, 64, 4
    $region25: #{tpu_custom_call.1} parent=1 // pred_fallthru
      _
    // Predicated region
    $region26: #{tpu_custom_call.1} parent=1 // pred_check
      _
    $region27: #{tpu_custom_call.1} parent=1 // pred_check_branch
      %80 = sbr.rel (0) target = $region29
    $region28: #{tpu_custom_call.1} parent=1 // pred_region
      _
    $region29: #{tpu_custom_call.1} parent=1 // pred_fallthru
      _
    // Predicated region
    $region30: #{tpu_custom_call.1} parent=1 // pred_check
      _
    $region31: #{tpu_custom_call.1} parent=1 // pred_check_branch
      %82 = sbr.rel (0) target = $region33
    $region32: #{tpu_custom_call.1} parent=1 // pred_region
      %84 = dma.done [#allocation4], 1024
    $region33: #{tpu_custom_call.1} parent=1 // pred_fallthru
      _
    // Predicated region
    $region34: #{tpu_custom_call.1} parent=1 // pred_check
      _
    $region35: #{tpu_custom_call.1} parent=1 // pred_check_branch
      %86 = sbr.rel (0) target = $region37
    $region36: #{tpu_custom_call.1} parent=1 // pred_region
      %88 = dma.done [#allocation7], 16
    $region37: #{tpu_custom_call.1} parent=1 // pred_fallthru
      _
    // Predicated region
    $region38: #{tpu_custom_call.1} parent=1 // pred_check
      _
    $region39: #{tpu_custom_call.1} parent=1 // pred_check_branch
      %90 = sbr.rel (0) target = $region41
    $region40: #{tpu_custom_call.1} parent=1 // pred_region
      %92 = dma.done [#allocation7], 4096
    $region41: #{tpu_custom_call.1} parent=1 // pred_fallthru
      _
    // Predicated region
    $region42: #{tpu_custom_call.1} parent=1 // pred_check
      _
    $region43: #{tpu_custom_call.1} parent=1 // pred_check_branch
      %94 = sbr.rel (0) target = $region45
    $region44: #{tpu_custom_call.1} parent=1 // pred_region
      %96 = dma.done [#allocation10], 64
    $region45: #{tpu_custom_call.1} parent=1 // pred_fallthru
      _
    // Predicated region
    $region46: #{tpu_custom_call.1} parent=1 // pred_check
      _
    $region47: #{tpu_custom_call.1} parent=1 // pred_check_branch
      %98 = sbr.rel (0) target = $region49
    $region48: #{tpu_custom_call.1} parent=1 // pred_region
      %100 = dma.done [#allocation10], 4096
    $region49: #{tpu_custom_call.1} parent=1 // pred_fallthru
      _
    %p101 = scmp.eq.s32.totalorder 0, 0
    // Predicated region
    $region50: #{tpu_custom_call.1} parent=1 // pred_check
      %p102 = pneg %p101
    $region51: #{tpu_custom_call.1} parent=1 // pred_check_branch
      %104 = sbr.rel (%p102) target = $region53
    $region52: #{tpu_custom_call.1} parent=1 // pred_region
      %v105 = vld [vmem:[#allocation3] sm:$0xff]
      %v106 = vld [vmem:[#allocation3 + $0x8] sm:$0xff]
      %v107 = vld [vmem:[#allocation3 + $0x10] sm:$0xff]
      %v108 = vld [vmem:[#allocation3 + $0x18] sm:$0xff]
      %v109 = vld [vmem:[#allocation3 + $0x20] sm:$0xff]
      %v110 = vld [vmem:[#allocation3 + $0x28] sm:$0xff]
      %v111 = vld [vmem:[#allocation3 + $0x30] sm:$0xff]
      %v112 = vld [vmem:[#allocation3 + $0x38] sm:$0xff]
      %113 = vadd.xlane.f32.xlu0 %v105
      %v114 = vpop.xlane.xlu0 %113
      %115 = vadd.xlane.f32.xlu0 %v106
      %v116 = vpop.xlane.xlu0 %115
      %117 = vadd.xlane.f32.xlu0 %v107
      %v118 = vpop.xlane.xlu0 %117
      %119 = vadd.xlane.f32.xlu0 %v108
      %v120 = vpop.xlane.xlu0 %119
      %121 = vadd.xlane.f32.xlu0 %v109
      %v122 = vpop.xlane.xlu0 %121
      %123 = vadd.xlane.f32.xlu0 %v110
      %v124 = vpop.xlane.xlu0 %123
      %125 = vadd.xlane.f32.xlu0 %v111
      %v126 = vpop.xlane.xlu0 %125
      %127 = vadd.xlane.f32.xlu0 %v112
      %v128 = vpop.xlane.xlu0 %127
      %v129 = vrcp.pop 128.0
      %v130 = vmul.f32 128.0, %v129
      %v131 = vsub.f32 1.0, %v130
      %v132 = vmul.f32 %v129, %v131
      %v133 = vadd.f32 %v129, %v132
      %vm134 = vweird.f32 %v129
      %v135 = vsel %vm134, %v129, %v133
      %v136 = vmul.f32 %v114, %v135
      %v137 = vmul.f32 %v116, %v135
      %v138 = vmul.f32 %v118, %v135
      %v139 = vmul.f32 %v120, %v135
      %v140 = vmul.f32 %v122, %v135
      %v141 = vmul.f32 %v124, %v135
      %v142 = vmul.f32 %v126, %v135
      %v143 = vmul.f32 %v128, %v135
      %v144 = vsub.f32 %v105, %v136
      %v145 = vsub.f32 %v106, %v137
      %v146 = vsub.f32 %v107, %v138
      %v147 = vsub.f32 %v108, %v139
      %v148 = vsub.f32 %v109, %v140
      %v149 = vsub.f32 %v110, %v141
      %v150 = vsub.f32 %v111, %v142
      %v151 = vsub.f32 %v112, %v143
      %v152 = vmul.f32 %v144, %v144
      %v153 = vmul.f32 %v145, %v145
      %v154 = vmul.f32 %v146, %v146
      %v155 = vmul.f32 %v147, %v147
      %v156 = vmul.f32 %v148, %v148
      %v157 = vmul.f32 %v149, %v149
      %v158 = vmul.f32 %v150, %v150
      %v159 = vmul.f32 %v151, %v151
      %160 = vadd.xlane.f32.xlu0 %v152
      %v161 = vpop.xlane.xlu0 %160
      %162 = vadd.xlane.f32.xlu0 %v153
      %v163 = vpop.xlane.xlu0 %162
      %164 = vadd.xlane.f32.xlu0 %v154
      %v165 = vpop.xlane.xlu0 %164
      %166 = vadd.xlane.f32.xlu0 %v155
      %v167 = vpop.xlane.xlu0 %166
      %168 = vadd.xlane.f32.xlu0 %v156
      %v169 = vpop.xlane.xlu0 %168
      %170 = vadd.xlane.f32.xlu0 %v157
      %v171 = vpop.xlane.xlu0 %170
      %172 = vadd.xlane.f32.xlu0 %v158
      %v173 = vpop.xlane.xlu0 %172
      %174 = vadd.xlane.f32.xlu0 %v159
      %v175 = vpop.xlane.xlu0 %174
      %v176 = vmul.f32 %v161, %v135
      %v177 = vmul.f32 %v163, %v135
      %v178 = vmul.f32 %v165, %v135
      %v179 = vmul.f32 %v167, %v135
      %v180 = vmul.f32 %v169, %v135
      %v181 = vmul.f32 %v171, %v135
      %v182 = vmul.f32 %v173, %v135
      %v183 = vmul.f32 %v175, %v135
      %v184 = vadd.f32 %v176, 1e-05
      %v185 = vadd.f32 %v177, 1e-05
      %v186 = vadd.f32 %v178, 1e-05
      %v187 = vadd.f32 %v179, 1e-05
      %v188 = vadd.f32 %v180, 1e-05
      %v189 = vadd.f32 %v181, 1e-05
      %v190 = vadd.f32 %v182, 1e-05
      %v191 = vadd.f32 %v183, 1e-05
      %v192 = vrsqrt.pop %v184
      %v193 = vmul.f32 %v192, %v184
      %v194 = vmul.f32 %v193, %v192
      %v195 = vmul.f32 0.5, %v194
      %v196 = vsub.f32 1.5, %v195
      %v197 = vmul.f32 %v192, %v196
      %vm198 = vweird.f32 %v184
      %vm199 = vweird.f32 %v192
      %vm200 = vmor %vm198, %vm199
      %v201 = vsel %vm200, %v192, %v197
      %v202 = vrsqrt.pop %v185
      %v203 = vmul.f32 %v202, %v185
      %v204 = vmul.f32 %v203, %v202
      %v205 = vmul.f32 0.5, %v204
      %v206 = vsub.f32 1.5, %v205
      %v207 = vmul.f32 %v202, %v206
      %vm208 = vweird.f32 %v185
      %vm209 = vweird.f32 %v202
      %vm210 = vmor %vm208, %vm209
      %v211 = vsel %vm210, %v202, %v207
      %v212 = vrsqrt.pop %v186
      %v213 = vmul.f32 %v212, %v186
      %v214 = vmul.f32 %v213, %v212
      %v215 = vmul.f32 0.5, %v214
      %v216 = vsub.f32 1.5, %v215
      %v217 = vmul.f32 %v212, %v216
      %vm218 = vweird.f32 %v186
      %vm219 = vweird.f32 %v212
      %vm220 = vmor %vm218, %vm219
      %v221 = vsel %vm220, %v212, %v217
      %v222 = vrsqrt.pop %v187
      %v223 = vmul.f32 %v222, %v187
      %v224 = vmul.f32 %v223, %v222
      %v225 = vmul.f32 0.5, %v224
      %v226 = vsub.f32 1.5, %v225
      %v227 = vmul.f32 %v222, %v226
      %vm228 = vweird.f32 %v187
      %vm229 = vweird.f32 %v222
      %vm230 = vmor %vm228, %vm229
      %v231 = vsel %vm230, %v222, %v227
      %v232 = vrsqrt.pop %v188
      %v233 = vmul.f32 %v232, %v188
      %v234 = vmul.f32 %v233, %v232
      %v235 = vmul.f32 0.5, %v234
      %v236 = vsub.f32 1.5, %v235
      %v237 = vmul.f32 %v232, %v236
      %vm238 = vweird.f32 %v188
      %vm239 = vweird.f32 %v232
      %vm240 = vmor %vm238, %vm239
      %v241 = vsel %vm240, %v232, %v237
      %v242 = vrsqrt.pop %v189
      %v243 = vmul.f32 %v242, %v189
      %v244 = vmul.f32 %v243, %v242
      %v245 = vmul.f32 0.5, %v244
      %v246 = vsub.f32 1.5, %v245
      %v247 = vmul.f32 %v242, %v246
      %vm248 = vweird.f32 %v189
      %vm249 = vweird.f32 %v242
      %vm250 = vmor %vm248, %vm249
      %v251 = vsel %vm250, %v242, %v247
      %v252 = vrsqrt.pop %v190
      %v253 = vmul.f32 %v252, %v190
      %v254 = vmul.f32 %v253, %v252
      %v255 = vmul.f32 0.5, %v254
      %v256 = vsub.f32 1.5, %v255
      %v257 = vmul.f32 %v252, %v256
      %vm258 = vweird.f32 %v190
      %vm259 = vweird.f32 %v252
      %vm260 = vmor %vm258, %vm259
      %v261 = vsel %vm260, %v252, %v257
      %v262 = vrsqrt.pop %v191
      %v263 = vmul.f32 %v262, %v191
      %v264 = vmul.f32 %v263, %v262
      %v265 = vmul.f32 0.5, %v264
      %v266 = vsub.f32 1.5, %v265
      %v267 = vmul.f32 %v262, %v266
      %vm268 = vweird.f32 %v191
      %vm269 = vweird.f32 %v262
      %vm270 = vmor %vm268, %vm269
      %v271 = vsel %vm270, %v262, %v267
      %v272 = vmul.f32 %v144, %v201
      %v273 = vmul.f32 %v145, %v211
      %v274 = vmul.f32 %v146, %v221
      %v275 = vmul.f32 %v147, %v231
      %v276 = vmul.f32 %v148, %v241
      %v277 = vmul.f32 %v149, %v251
      %v278 = vmul.f32 %v150, %v261
      %v279 = vmul.f32 %v151, %v271
      %v280 = vld [vmem:[#allocation6] sm:$0x1]
      %v282 = vperm.slane %v280, 0
      %v284 = vmul.f32 %v272, %v282
      %v285 = vmul.f32 %v273, %v282
      %v286 = vmul.f32 %v274, %v282
      %v287 = vmul.f32 %v275, %v282
      %v288 = vmul.f32 %v276, %v282
      %v289 = vmul.f32 %v277, %v282
      %v290 = vmul.f32 %v278, %v282
      %v291 = vmul.f32 %v279, %v282
      %v292 = vld [vmem:[%s2] sm:$0x1]
      %v294 = vperm.slane %v292, 0
      %v296 = vadd.f32 %v284, %v294
      %v297 = vadd.f32 %v285, %v294
      %v298 = vadd.f32 %v286, %v294
      %v299 = vadd.f32 %v287, %v294
      %v300 = vadd.f32 %v288, %v294
      %v301 = vadd.f32 %v289, %v294
      %v302 = vadd.f32 %v290, %v294
      %v303 = vadd.f32 %v291, %v294
      %v304 = vpack.c.bf16 %v296, %v296
      %v305 = vpack.c.bf16 %v297, %v297
      %v306 = vpack.c.bf16 %v298, %v298
      %v307 = vpack.c.bf16 %v299, %v299
      %v308 = vpack.c.bf16 %v300, %v300
      %v309 = vpack.c.bf16 %v301, %v301
      %v310 = vpack.c.bf16 %v302, %v302
      %v311 = vpack.c.bf16 %v303, %v303
      %312 = vst [vmem:[#allocation2] sm:$0xf] %v304
      %313 = vst [vmem:[#allocation2 + $0x4] sm:$0xf] %v305
      %314 = vst [vmem:[#allocation2 + $0x8] sm:$0xf] %v306
      %315 = vst [vmem:[#allocation2 + $0xc] sm:$0xf] %v307
      %316 = vst [vmem:[#allocation2 + $0x10] sm:$0xf] %v308
      %317 = vst [vmem:[#allocation2 + $0x14] sm:$0xf] %v309
      %318 = vst [vmem:[#allocation2 + $0x18] sm:$0xf] %v310
      %319 = vst [vmem:[#allocation2 + $0x1c] sm:$0xf] %v311
    $region53: #{tpu_custom_call.1} parent=1 // pred_fallthru
      _
    %v320 = vld [vmem:[#allocation2] sm:$0xf]
    %v321 = vld [vmem:[#allocation2 + $0x4] sm:$0xf]
    %v322 = vld [vmem:[#allocation2 + $0x8] sm:$0xf]
    %v323 = vld [vmem:[#allocation2 + $0xc] sm:$0xf]
    %v324 = vld [vmem:[#allocation2 + $0x10] sm:$0xf]
    %v325 = vld [vmem:[#allocation2 + $0x14] sm:$0xf]
    %v326 = vld [vmem:[#allocation2 + $0x18] sm:$0xf]
    %v327 = vld [vmem:[#allocation2 + $0x1c] sm:$0xf]
    %v328 = vld [vmem:[#allocation8] sm:$0xff]
    %v329 = vld [vmem:[#allocation8 + $0x8] sm:$0xff]
    %v330 = vld [vmem:[#allocation8 + $0x10] sm:$0xff]
    %v331 = vld [vmem:[#allocation8 + $0x18] sm:$0xff]
    %v332 = vld [vmem:[#allocation8 + $0x20] sm:$0xff]
    %v333 = vld [vmem:[#allocation8 + $0x28] sm:$0xff]
    %v334 = vld [vmem:[#allocation8 + $0x30] sm:$0xff]
    %v335 = vld [vmem:[#allocation8 + $0x38] sm:$0xff]
    %v336 = vld [vmem:[#allocation8 + $0x40] sm:$0xff]
    %v337 = vld [vmem:[#allocation8 + $0x48] sm:$0xff]
    %v338 = vld [vmem:[#allocation8 + $0x50] sm:$0xff]
    %v339 = vld [vmem:[#allocation8 + $0x58] sm:$0xff]
    %v340 = vld [vmem:[#allocation8 + $0x60] sm:$0xff]
    %v341 = vld [vmem:[#allocation8 + $0x68] sm:$0xff]
    %v342 = vld [vmem:[#allocation8 + $0x70] sm:$0xff]
    %v343 = vld [vmem:[#allocation8 + $0x78] sm:$0xff]
    %v344 = vld [vmem:[#allocation8 + $0x80] sm:$0xff]
    %v345 = vld [vmem:[#allocation8 + $0x88] sm:$0xff]
    %v346 = vld [vmem:[#allocation8 + $0x90] sm:$0xff]
    %v347 = vld [vmem:[#allocation8 + $0x98] sm:$0xff]
    %v348 = vld [vmem:[#allocation8 + $0xa0] sm:$0xff]
    %v349 = vld [vmem:[#allocation8 + $0xa8] sm:$0xff]
    %v350 = vld [vmem:[#allocation8 + $0xb0] sm:$0xff]
    %v351 = vld [vmem:[#allocation8 + $0xb8] sm:$0xff]
    %v352 = vld [vmem:[#allocation8 + $0xc0] sm:$0xff]
    %v353 = vld [vmem:[#allocation8 + $0xc8] sm:$0xff]
    %v354 = vld [vmem:[#allocation8 + $0xd0] sm:$0xff]
    %v355 = vld [vmem:[#allocation8 + $0xd8] sm:$0xff]
    %v356 = vld [vmem:[#allocation8 + $0xe0] sm:$0xff]
    %v357 = vld [vmem:[#allocation8 + $0xe8] sm:$0xff]
    %v358 = vld [vmem:[#allocation8 + $0xf0] sm:$0xff]
    %v359 = vld [vmem:[#allocation8 + $0xf8] sm:$0xff]
    %v360 = vld [vmem:[#allocation9] sm:$0xf]
    %v362 = vperm.slane %v360, 0
    %v363 = vperm.slane %v360, 1
    %v364 = vperm.slane %v360, 2
    %v365 = vperm.slane %v360, 3
    %v378 = vunpack.c.l.b16 %v320
    %v379 = vunpack.c.l.b16 %v321
    %v380 = vunpack.c.l.b16 %v322
    %v381 = vunpack.c.l.b16 %v323
    %v382 = vunpack.c.l.b16 %v324
    %v383 = vunpack.c.l.b16 %v325
    %v384 = vunpack.c.l.b16 %v326
    %v385 = vunpack.c.l.b16 %v327
    %v386 = vpack.c.b16 %v379, %v378
    %v387 = vpack.c.b16 %v381, %v380
    %v388 = vpack.c.b16 %v383, %v382
    %v389 = vpack.c.b16 %v385, %v384
    %v426 = vunpack.c.l.b16 %v328
    %v427 = vunpack.c.h.b16 %v328
    %v428 = vunpack.c.l.b16 %v329
    %v429 = vunpack.c.h.b16 %v329
    %v430 = vunpack.c.l.b16 %v330
    %v431 = vunpack.c.h.b16 %v330
    %v432 = vunpack.c.l.b16 %v331
    %v433 = vunpack.c.h.b16 %v331
    %v434 = vunpack.c.l.b16 %v332
    %v435 = vunpack.c.h.b16 %v332
    %v436 = vunpack.c.l.b16 %v333
    %v437 = vunpack.c.h.b16 %v333
    %v438 = vunpack.c.l.b16 %v334
    %v439 = vunpack.c.h.b16 %v334
    %v440 = vunpack.c.l.b16 %v335
    %v441 = vunpack.c.h.b16 %v335
    %v442 = vunpack.c.l.b16 %v336
    %v443 = vunpack.c.h.b16 %v336
    %v444 = vunpack.c.l.b16 %v337
    %v445 = vunpack.c.h.b16 %v337
    %v446 = vunpack.c.l.b16 %v338
    %v447 = vunpack.c.h.b16 %v338
    %v448 = vunpack.c.l.b16 %v339
    %v449 = vunpack.c.h.b16 %v339
    %v450 = vunpack.c.l.b16 %v340
    %v451 = vunpack.c.h.b16 %v340
    %v452 = vunpack.c.l.b16 %v341
    %v453 = vunpack.c.h.b16 %v341
    %v454 = vunpack.c.l.b16 %v342
    %v455 = vunpack.c.h.b16 %v342
    %v456 = vunpack.c.l.b16 %v343
    %v457 = vunpack.c.h.b16 %v343
    %v458 = vunpack.c.l.b16 %v344
    %v459 = vunpack.c.h.b16 %v344
    %v460 = vunpack.c.l.b16 %v345
    %v461 = vunpack.c.h.b16 %v345
    %v462 = vunpack.c.l.b16 %v346
    %v463 = vunpack.c.h.b16 %v346
    %v464 = vunpack.c.l.b16 %v347
    %v465 = vunpack.c.h.b16 %v347
    %v466 = vunpack.c.l.b16 %v348
    %v467 = vunpack.c.h.b16 %v348
    %v468 = vunpack.c.l.b16 %v349
    %v469 = vunpack.c.h.b16 %v349
    %v470 = vunpack.c.l.b16 %v350
    %v471 = vunpack.c.h.b16 %v350
    %v472 = vunpack.c.l.b16 %v351
    %v473 = vunpack.c.h.b16 %v351
    %v474 = vunpack.c.l.b16 %v352
    %v475 = vunpack.c.h.b16 %v352
    %v476 = vunpack.c.l.b16 %v353
    %v477 = vunpack.c.h.b16 %v353
    %v478 = vunpack.c.l.b16 %v354
    %v479 = vunpack.c.h.b16 %v354
    %v480 = vunpack.c.l.b16 %v355
    %v481 = vunpack.c.h.b16 %v355
    %v482 = vunpack.c.l.b16 %v356
    %v483 = vunpack.c.h.b16 %v356
    %v484 = vunpack.c.l.b16 %v357
    %v485 = vunpack.c.h.b16 %v357
    %v486 = vunpack.c.l.b16 %v358
    %v487 = vunpack.c.h.b16 %v358
    %v488 = vunpack.c.l.b16 %v359
    %v489 = vunpack.c.h.b16 %v359
    %v490 = vpack.c.b16 %v430, %v426
    %v491 = vpack.c.b16 %v431, %v427
    %v492 = vpack.c.b16 %v432, %v428
    %v493 = vpack.c.b16 %v433, %v429
    %v494 = vpack.c.b16 %v438, %v434
    %v495 = vpack.c.b16 %v439, %v435
    %v496 = vpack.c.b16 %v440, %v436
    %v497 = vpack.c.b16 %v441, %v437
    %v498 = vpack.c.b16 %v446, %v442
    %v499 = vpack.c.b16 %v447, %v443
    %v500 = vpack.c.b16 %v448, %v444
    %v501 = vpack.c.b16 %v449, %v445
    %v502 = vpack.c.b16 %v454, %v450
    %v503 = vpack.c.b16 %v455, %v451
    %v504 = vpack.c.b16 %v456, %v452
    %v505 = vpack.c.b16 %v457, %v453
    %v506 = vpack.c.b16 %v462, %v458
    %v507 = vpack.c.b16 %v463, %v459
    %v508 = vpack.c.b16 %v464, %v460
    %v509 = vpack.c.b16 %v465, %v461
    %v510 = vpack.c.b16 %v470, %v466
    %v511 = vpack.c.b16 %v471, %v467
    %v512 = vpack.c.b16 %v472, %v468
    %v513 = vpack.c.b16 %v473, %v469
    %v514 = vpack.c.b16 %v478, %v474
    %v515 = vpack.c.b16 %v479, %v475
    %v516 = vpack.c.b16 %v480, %v476
    %v517 = vpack.c.b16 %v481, %v477
    %v518 = vpack.c.b16 %v486, %v482
    %v519 = vpack.c.b16 %v487, %v483
    %v520 = vpack.c.b16 %v488, %v484
    %v521 = vpack.c.b16 %v489, %v485
    %554 = vmatpush.bf16.msra.mxu0 %v518
    %555 = vmatpush.bf16.msra.mxu0 %v514
    %556 = vmatpush.bf16.msra.mxu0 %v510
    %557 = vmatpush.bf16.msra.mxu0 %v506
    %558 = vmatpush.bf16.msra.mxu0 %v502
    %559 = vmatpush.bf16.msra.mxu0 %v498
    %560 = vmatpush.bf16.msra.mxu0 %v494
    %561 = vmatpush.bf16.msra.mxu0 %v490
    %562 = vmatmul.bf16.gmra.mxu0 %v386
    %v563 = vpop.f32.mrf.mxu0
    %v564 = vadd.f32 %v362, %v563
    %v565 = vpop.f32.mrf.mxu0
    %v566 = vadd.f32 %v362, %v565
    %567 = vmatmul.bf16.gmra.mxu0 %v387
    %v568 = vpop.f32.mrf.mxu0
    %v569 = vadd.f32 %v362, %v568
    %v570 = vpop.f32.mrf.mxu0
    %v571 = vadd.f32 %v362, %v570
    %572 = vmatmul.bf16.gmra.mxu0 %v388
    %v573 = vpop.f32.mrf.mxu0
    %v574 = vadd.f32 %v362, %v573
    %v575 = vpop.f32.mrf.mxu0
    %v576 = vadd.f32 %v362, %v575
    %577 = vmatmul.bf16.gmra.mxu0 %v389
    %v578 = vpop.f32.mrf.mxu0
    %v579 = vadd.f32 %v362, %v578
    %v580 = vpop.f32.mrf.mxu0
    %v581 = vadd.f32 %v362, %v580
    %582 = vdwg.mxu0
    %583 = vmatpush.bf16.msra.mxu0 %v519
    %584 = vmatpush.bf16.msra.mxu0 %v515
    %585 = vmatpush.bf16.msra.mxu0 %v511
    %586 = vmatpush.bf16.msra.mxu0 %v507
    %587 = vmatpush.bf16.msra.mxu0 %v503
    %588 = vmatpush.bf16.msra.mxu0 %v499
    %589 = vmatpush.bf16.msra.mxu0 %v495
    %590 = vmatpush.bf16.msra.mxu0 %v491
    %591 = vmatmul.bf16.gmra.mxu0 %v386
    %v592 = vpop.f32.mrf.mxu0
    %v593 = vadd.f32 %v363, %v592
    %v594 = vpop.f32.mrf.mxu0
    %v595 = vadd.f32 %v363, %v594
    %596 = vmatmul.bf16.gmra.mxu0 %v387
    %v597 = vpop.f32.mrf.mxu0
    %v598 = vadd.f32 %v363, %v597
    %v599 = vpop.f32.mrf.mxu0
    %v600 = vadd.f32 %v363, %v599
    %601 = vmatmul.bf16.gmra.mxu0 %v388
    %v602 = vpop.f32.mrf.mxu0
    %v603 = vadd.f32 %v363, %v602
    %v604 = vpop.f32.mrf.mxu0
    %v605 = vadd.f32 %v363, %v604
    %606 = vmatmul.bf16.gmra.mxu0 %v389
    %v607 = vpop.f32.mrf.mxu0
    %v608 = vadd.f32 %v363, %v607
    %v609 = vpop.f32.mrf.mxu0
    %v610 = vadd.f32 %v363, %v609
    %611 = vdwg.mxu0
    %612 = vmatpush.bf16.msra.mxu0 %v520
    %613 = vmatpush.bf16.msra.mxu0 %v516
    %614 = vmatpush.bf16.msra.mxu0 %v512
    %615 = vmatpush.bf16.msra.mxu0 %v508
    %616 = vmatpush.bf16.msra.mxu0 %v504
    %617 = vmatpush.bf16.msra.mxu0 %v500
    %618 = vmatpush.bf16.msra.mxu0 %v496
    %619 = vmatpush.bf16.msra.mxu0 %v492
    %620 = vmatmul.bf16.gmra.mxu0 %v386
    %v621 = vpop.f32.mrf.mxu0
    %v622 = vadd.f32 %v364, %v621
    %v623 = vpop.f32.mrf.mxu0
    %v624 = vadd.f32 %v364, %v623
    %625 = vmatmul.bf16.gmra.mxu0 %v387
    %v626 = vpop.f32.mrf.mxu0
    %v627 = vadd.f32 %v364, %v626
    %v628 = vpop.f32.mrf.mxu0
    %v629 = vadd.f32 %v364, %v628
    %630 = vmatmul.bf16.gmra.mxu0 %v388
    %v631 = vpop.f32.mrf.mxu0
    %v632 = vadd.f32 %v364, %v631
    %v633 = vpop.f32.mrf.mxu0
    %v634 = vadd.f32 %v364, %v633
    %635 = vmatmul.bf16.gmra.mxu0 %v389
    %v636 = vpop.f32.mrf.mxu0
    %v637 = vadd.f32 %v364, %v636
    %v638 = vpop.f32.mrf.mxu0
    %v639 = vadd.f32 %v364, %v638
    %640 = vdwg.mxu0
    %641 = vmatpush.bf16.msra.mxu0 %v521
    %642 = vmatpush.bf16.msra.mxu0 %v517
    %643 = vmatpush.bf16.msra.mxu0 %v513
    %644 = vmatpush.bf16.msra.mxu0 %v509
    %645 = vmatpush.bf16.msra.mxu0 %v505
    %646 = vmatpush.bf16.msra.mxu0 %v501
    %647 = vmatpush.bf16.msra.mxu0 %v497
    %648 = vmatpush.bf16.msra.mxu0 %v493
    %649 = vmatmul.bf16.gmra.mxu0 %v386
    %v650 = vpop.f32.mrf.mxu0
    %v651 = vadd.f32 %v365, %v650
    %v652 = vpop.f32.mrf.mxu0
    %v653 = vadd.f32 %v365, %v652
    %654 = vmatmul.bf16.gmra.mxu0 %v387
    %v655 = vpop.f32.mrf.mxu0
    %v656 = vadd.f32 %v365, %v655
    %v657 = vpop.f32.mrf.mxu0
    %v658 = vadd.f32 %v365, %v657
    %659 = vmatmul.bf16.gmra.mxu0 %v388
    %v660 = vpop.f32.mrf.mxu0
    %v661 = vadd.f32 %v365, %v660
    %v662 = vpop.f32.mrf.mxu0
    %v663 = vadd.f32 %v365, %v662
    %664 = vmatmul.bf16.gmra.mxu0 %v389
    %v665 = vpop.f32.mrf.mxu0
    %v666 = vadd.f32 %v365, %v665
    %v667 = vpop.f32.mrf.mxu0
    %v668 = vadd.f32 %v365, %v667
    %669 = vdwg.mxu0
    %v670 = vmax.f32 %v564, 0.0
    %v671 = vmax.f32 %v593, 0.0
    %v672 = vmax.f32 %v622, 0.0
    %v673 = vmax.f32 %v651, 0.0
    %v674 = vmax.f32 %v566, 0.0
    %v675 = vmax.f32 %v595, 0.0
    %v676 = vmax.f32 %v624, 0.0
    %v677 = vmax.f32 %v653, 0.0
    %v678 = vmax.f32 %v569, 0.0
    %v679 = vmax.f32 %v598, 0.0
    %v680 = vmax.f32 %v627, 0.0
    %v681 = vmax.f32 %v656, 0.0
    %v682 = vmax.f32 %v571, 0.0
    %v683 = vmax.f32 %v600, 0.0
    %v684 = vmax.f32 %v629, 0.0
    %v685 = vmax.f32 %v658, 0.0
    %v686 = vmax.f32 %v574, 0.0
    %v687 = vmax.f32 %v603, 0.0
    %v688 = vmax.f32 %v632, 0.0
    %v689 = vmax.f32 %v661, 0.0
    %v690 = vmax.f32 %v576, 0.0
    %v691 = vmax.f32 %v605, 0.0
    %v692 = vmax.f32 %v634, 0.0
    %v693 = vmax.f32 %v663, 0.0
    %v694 = vmax.f32 %v579, 0.0
    %v695 = vmax.f32 %v608, 0.0
    %v696 = vmax.f32 %v637, 0.0
    %v697 = vmax.f32 %v666, 0.0
    %v698 = vmax.f32 %v581, 0.0
    %v699 = vmax.f32 %v610, 0.0
    %v700 = vmax.f32 %v639, 0.0
    %v701 = vmax.f32 %v668, 0.0
    %v702 = vpack.c.bf16 %v674, %v670
    %v703 = vpack.c.bf16 %v675, %v671
    %v704 = vpack.c.bf16 %v676, %v672
    %v705 = vpack.c.bf16 %v677, %v673
    %v706 = vpack.c.bf16 %v682, %v678
    %v707 = vpack.c.bf16 %v683, %v679
    %v708 = vpack.c.bf16 %v684, %v680
    %v709 = vpack.c.bf16 %v685, %v681
    %v710 = vpack.c.bf16 %v690, %v686
    %v711 = vpack.c.bf16 %v691, %v687
    %v712 = vpack.c.bf16 %v692, %v688
    %v713 = vpack.c.bf16 %v693, %v689
    %v714 = vpack.c.bf16 %v698, %v694
    %v715 = vpack.c.bf16 %v699, %v695
    %v716 = vpack.c.bf16 %v700, %v696
    %v717 = vpack.c.bf16 %v701, %v697
    %v718 = vld [vmem:[#allocation11] sm:$0xf]
    %v719 = vld [vmem:[#allocation11 + $0x4] sm:$0xf]
    %v720 = vld [vmem:[#allocation11 + $0x8] sm:$0xf]
    %v721 = vld [vmem:[#allocation11 + $0xc] sm:$0xf]
    %v722 = vld [vmem:[#allocation11 + $0x10] sm:$0xf]
    %v723 = vld [vmem:[#allocation11 + $0x14] sm:$0xf]
    %v724 = vld [vmem:[#allocation11 + $0x18] sm:$0xf]
    %v725 = vld [vmem:[#allocation11 + $0x1c] sm:$0xf]
    %v726 = vld [vmem:[#allocation11 + $0x20] sm:$0xf]
    %v727 = vld [vmem:[#allocation11 + $0x24] sm:$0xf]
    %v728 = vld [vmem:[#allocation11 + $0x28] sm:$0xf]
    %v729 = vld [vmem:[#allocation11 + $0x2c] sm:$0xf]
    %v730 = vld [vmem:[#allocation11 + $0x30] sm:$0xf]
    %v731 = vld [vmem:[#allocation11 + $0x34] sm:$0xf]
    %v732 = vld [vmem:[#allocation11 + $0x38] sm:$0xf]
    %v733 = vld [vmem:[#allocation11 + $0x3c] sm:$0xf]
    %v734 = vld [vmem:[#allocation11 + $0x40] sm:$0xf]
    %v735 = vld [vmem:[#allocation11 + $0x44] sm:$0xf]
    %v736 = vld [vmem:[#allocation11 + $0x48] sm:$0xf]
    %v737 = vld [vmem:[#allocation11 + $0x4c] sm:$0xf]
    %v738 = vld [vmem:[#allocation11 + $0x50] sm:$0xf]
    %v739 = vld [vmem:[#allocation11 + $0x54] sm:$0xf]
    %v740 = vld [vmem:[#allocation11 + $0x58] sm:$0xf]
    %v741 = vld [vmem:[#allocation11 + $0x5c] sm:$0xf]
    %v742 = vld [vmem:[#allocation11 + $0x60] sm:$0xf]
    %v743 = vld [vmem:[#allocation11 + $0x64] sm:$0xf]
    %v744 = vld [vmem:[#allocation11 + $0x68] sm:$0xf]
    %v745 = vld [vmem:[#allocation11 + $0x6c] sm:$0xf]
    %v746 = vld [vmem:[#allocation11 + $0x70] sm:$0xf]
    %v747 = vld [vmem:[#allocation11 + $0x74] sm:$0xf]
    %v748 = vld [vmem:[#allocation11 + $0x78] sm:$0xf]
    %v749 = vld [vmem:[#allocation11 + $0x7c] sm:$0xf]
    %v750 = vld [vmem:[#allocation11 + $0x80] sm:$0xf]
    %v751 = vld [vmem:[#allocation11 + $0x84] sm:$0xf]
    %v752 = vld [vmem:[#allocation11 + $0x88] sm:$0xf]
    %v753 = vld [vmem:[#allocation11 + $0x8c] sm:$0xf]
    %v754 = vld [vmem:[#allocation11 + $0x90] sm:$0xf]
    %v755 = vld [vmem:[#allocation11 + $0x94] sm:$0xf]
    %v756 = vld [vmem:[#allocation11 + $0x98] sm:$0xf]
    %v757 = vld [vmem:[#allocation11 + $0x9c] sm:$0xf]
    %v758 = vld [vmem:[#allocation11 + $0xa0] sm:$0xf]
    %v759 = vld [vmem:[#allocation11 + $0xa4] sm:$0xf]
    %v760 = vld [vmem:[#allocation11 + $0xa8] sm:$0xf]
    %v761 = vld [vmem:[#allocation11 + $0xac] sm:$0xf]
    %v762 = vld [vmem:[#allocation11 + $0xb0] sm:$0xf]
    %v763 = vld [vmem:[#allocation11 + $0xb4] sm:$0xf]
    %v764 = vld [vmem:[#allocation11 + $0xb8] sm:$0xf]
    %v765 = vld [vmem:[#allocation11 + $0xbc] sm:$0xf]
    %v766 = vld [vmem:[#allocation11 + $0xc0] sm:$0xf]
    %v767 = vld [vmem:[#allocation11 + $0xc4] sm:$0xf]
    %v768 = vld [vmem:[#allocation11 + $0xc8] sm:$0xf]
    %v769 = vld [vmem:[#allocation11 + $0xcc] sm:$0xf]
    %v770 = vld [vmem:[#allocation11 + $0xd0] sm:$0xf]
    %v771 = vld [vmem:[#allocation11 + $0xd4] sm:$0xf]
    %v772 = vld [vmem:[#allocation11 + $0xd8] sm:$0xf]
    %v773 = vld [vmem:[#allocation11 + $0xdc] sm:$0xf]
    %v774 = vld [vmem:[#allocation11 + $0xe0] sm:$0xf]
    %v775 = vld [vmem:[#allocation11 + $0xe4] sm:$0xf]
    %v776 = vld [vmem:[#allocation11 + $0xe8] sm:$0xf]
    %v777 = vld [vmem:[#allocation11 + $0xec] sm:$0xf]
    %v778 = vld [vmem:[#allocation11 + $0xf0] sm:$0xf]
    %v779 = vld [vmem:[#allocation11 + $0xf4] sm:$0xf]
    %v780 = vld [vmem:[#allocation11 + $0xf8] sm:$0xf]
    %v781 = vld [vmem:[#allocation11 + $0xfc] sm:$0xf]
    %v846 = vunpack.c.l.b16 %v718
    %v847 = vunpack.c.l.b16 %v719
    %v848 = vunpack.c.l.b16 %v720
    %v849 = vunpack.c.l.b16 %v721
    %v850 = vunpack.c.l.b16 %v722
    %v851 = vunpack.c.l.b16 %v723
    %v852 = vunpack.c.l.b16 %v724
    %v853 = vunpack.c.l.b16 %v725
    %v854 = vunpack.c.l.b16 %v726
    %v855 = vunpack.c.l.b16 %v727
    %v856 = vunpack.c.l.b16 %v728
    %v857 = vunpack.c.l.b16 %v729
    %v858 = vunpack.c.l.b16 %v730
    %v859 = vunpack.c.l.b16 %v731
    %v860 = vunpack.c.l.b16 %v732
    %v861 = vunpack.c.l.b16 %v733
    %v862 = vunpack.c.l.b16 %v734
    %v863 = vunpack.c.l.b16 %v735
    %v864 = vunpack.c.l.b16 %v736
    %v865 = vunpack.c.l.b16 %v737
    %v866 = vunpack.c.l.b16 %v738
    %v867 = vunpack.c.l.b16 %v739
    %v868 = vunpack.c.l.b16 %v740
    %v869 = vunpack.c.l.b16 %v741
    %v870 = vunpack.c.l.b16 %v742
    %v871 = vunpack.c.l.b16 %v743
    %v872 = vunpack.c.l.b16 %v744
    %v873 = vunpack.c.l.b16 %v745
    %v874 = vunpack.c.l.b16 %v746
    %v875 = vunpack.c.l.b16 %v747
    %v876 = vunpack.c.l.b16 %v748
    %v877 = vunpack.c.l.b16 %v749
    %v878 = vunpack.c.l.b16 %v750
    %v879 = vunpack.c.l.b16 %v751
    %v880 = vunpack.c.l.b16 %v752
    %v881 = vunpack.c.l.b16 %v753
    %v882 = vunpack.c.l.b16 %v754
    %v883 = vunpack.c.l.b16 %v755
    %v884 = vunpack.c.l.b16 %v756
    %v885 = vunpack.c.l.b16 %v757
    %v886 = vunpack.c.l.b16 %v758
    %v887 = vunpack.c.l.b16 %v759
    %v888 = vunpack.c.l.b16 %v760
    %v889 = vunpack.c.l.b16 %v761
    %v890 = vunpack.c.l.b16 %v762
    %v891 = vunpack.c.l.b16 %v763
    %v892 = vunpack.c.l.b16 %v764
    %v893 = vunpack.c.l.b16 %v765
    %v894 = vunpack.c.l.b16 %v766
    %v895 = vunpack.c.l.b16 %v767
    %v896 = vunpack.c.l.b16 %v768
    %v897 = vunpack.c.l.b16 %v769
    %v898 = vunpack.c.l.b16 %v770
    %v899 = vunpack.c.l.b16 %v771
    %v900 = vunpack.c.l.b16 %v772
    %v901 = vunpack.c.l.b16 %v773
    %v902 = vunpack.c.l.b16 %v774
    %v903 = vunpack.c.l.b16 %v775
    %v904 = vunpack.c.l.b16 %v776
    %v905 = vunpack.c.l.b16 %v777
    %v906 = vunpack.c.l.b16 %v778
    %v907 = vunpack.c.l.b16 %v779
    %v908 = vunpack.c.l.b16 %v780
    %v909 = vunpack.c.l.b16 %v781
    %v910 = vpack.c.b16 %v847, %v846
    %v911 = vpack.c.b16 %v849, %v848
    %v912 = vpack.c.b16 %v851, %v850
    %v913 = vpack.c.b16 %v853, %v852
    %v914 = vpack.c.b16 %v855, %v854
    %v915 = vpack.c.b16 %v857, %v856
    %v916 = vpack.c.b16 %v859, %v858
    %v917 = vpack.c.b16 %v861, %v860
    %v918 = vpack.c.b16 %v863, %v862
    %v919 = vpack.c.b16 %v865, %v864
    %v920 = vpack.c.b16 %v867, %v866
    %v921 = vpack.c.b16 %v869, %v868
    %v922 = vpack.c.b16 %v871, %v870
    %v923 = vpack.c.b16 %v873, %v872
    %v924 = vpack.c.b16 %v875, %v874
    %v925 = vpack.c.b16 %v877, %v876
    %v926 = vpack.c.b16 %v879, %v878
    %v927 = vpack.c.b16 %v881, %v880
    %v928 = vpack.c.b16 %v883, %v882
    %v929 = vpack.c.b16 %v885, %v884
    %v930 = vpack.c.b16 %v887, %v886
    %v931 = vpack.c.b16 %v889, %v888
    %v932 = vpack.c.b16 %v891, %v890
    %v933 = vpack.c.b16 %v893, %v892
    %v934 = vpack.c.b16 %v895, %v894
    %v935 = vpack.c.b16 %v897, %v896
    %v936 = vpack.c.b16 %v899, %v898
    %v937 = vpack.c.b16 %v901, %v900
    %v938 = vpack.c.b16 %v903, %v902
    %v939 = vpack.c.b16 %v905, %v904
    %v940 = vpack.c.b16 %v907, %v906
    %v941 = vpack.c.b16 %v909, %v908
    %974 = vmatpush.bf16.msra.mxu0 %v917
    %975 = vmatpush.bf16.msra.mxu0 %v916
    %976 = vmatpush.bf16.msra.mxu0 %v915
    %977 = vmatpush.bf16.msra.mxu0 %v914
    %978 = vmatpush.bf16.msra.mxu0 %v913
    %979 = vmatpush.bf16.msra.mxu0 %v912
    %980 = vmatpush.bf16.msra.mxu0 %v911
    %981 = vmatpush.bf16.msra.mxu0 %v910
    %982 = vmatmul.bf16.gmra.mxu0 %v702
    %v983 = vpop.f32.mrf.mxu0
    %v984 = vadd.f32 0.0, %v983
    %v985 = vpop.f32.mrf.mxu0
    %v986 = vadd.f32 0.0, %v985
    %987 = vmatmul.bf16.gmra.mxu0 %v706
    %v988 = vpop.f32.mrf.mxu0
    %v989 = vadd.f32 0.0, %v988
    %v990 = vpop.f32.mrf.mxu0
    %v991 = vadd.f32 0.0, %v990
    %992 = vmatmul.bf16.gmra.mxu0 %v710
    %v993 = vpop.f32.mrf.mxu0
    %v994 = vadd.f32 0.0, %v993
    %v995 = vpop.f32.mrf.mxu0
    %v996 = vadd.f32 0.0, %v995
    %997 = vmatmul.bf16.gmra.mxu0 %v714
    %v998 = vpop.f32.mrf.mxu0
    %v999 = vadd.f32 0.0, %v998
    %v1000 = vpop.f32.mrf.mxu0
    %v1001 = vadd.f32 0.0, %v1000
    %1002 = vdwg.mxu0
    %1003 = vmatpush.bf16.msra.mxu0 %v925
    %1004 = vmatpush.bf16.msra.mxu0 %v924
    %1005 = vmatpush.bf16.msra.mxu0 %v923
    %1006 = vmatpush.bf16.msra.mxu0 %v922
    %1007 = vmatpush.bf16.msra.mxu0 %v921
    %1008 = vmatpush.bf16.msra.mxu0 %v920
    %1009 = vmatpush.bf16.msra.mxu0 %v919
    %1010 = vmatpush.bf16.msra.mxu0 %v918
    %1011 = vmatmul.bf16.gmra.mxu0 %v703
    %v1012 = vpop.f32.mrf.mxu0
    %v1013 = vadd.f32 %v984, %v1012
    %v1014 = vpop.f32.mrf.mxu0
    %v1015 = vadd.f32 %v986, %v1014
    %1016 = vmatmul.bf16.gmra.mxu0 %v707
    %v1017 = vpop.f32.mrf.mxu0
    %v1018 = vadd.f32 %v989, %v1017
    %v1019 = vpop.f32.mrf.mxu0
    %v1020 = vadd.f32 %v991, %v1019
    %1021 = vmatmul.bf16.gmra.mxu0 %v711
    %v1022 = vpop.f32.mrf.mxu0
    %v1023 = vadd.f32 %v994, %v1022
    %v1024 = vpop.f32.mrf.mxu0
    %v1025 = vadd.f32 %v996, %v1024
    %1026 = vmatmul.bf16.gmra.mxu0 %v715
    %v1027 = vpop.f32.mrf.mxu0
    %v1028 = vadd.f32 %v999, %v1027
    %v1029 = vpop.f32.mrf.mxu0
    %v1030 = vadd.f32 %v1001, %v1029
    %1031 = vdwg.mxu0
    %1032 = vmatpush.bf16.msra.mxu0 %v933
    %1033 = vmatpush.bf16.msra.mxu0 %v932
    %1034 = vmatpush.bf16.msra.mxu0 %v931
    %1035 = vmatpush.bf16.msra.mxu0 %v930
    %1036 = vmatpush.bf16.msra.mxu0 %v929
    %1037 = vmatpush.bf16.msra.mxu0 %v928
    %1038 = vmatpush.bf16.msra.mxu0 %v927
    %1039 = vmatpush.bf16.msra.mxu0 %v926
    %1040 = vmatmul.bf16.gmra.mxu0 %v704
    %v1041 = vpop.f32.mrf.mxu0
    %v1042 = vadd.f32 %v1013, %v1041
    %v1043 = vpop.f32.mrf.mxu0
    %v1044 = vadd.f32 %v1015, %v1043
    %1045 = vmatmul.bf16.gmra.mxu0 %v708
    %v1046 = vpop.f32.mrf.mxu0
    %v1047 = vadd.f32 %v1018, %v1046
    %v1048 = vpop.f32.mrf.mxu0
    %v1049 = vadd.f32 %v1020, %v1048
    %1050 = vmatmul.bf16.gmra.mxu0 %v712
    %v1051 = vpop.f32.mrf.mxu0
    %v1052 = vadd.f32 %v1023, %v1051
    %v1053 = vpop.f32.mrf.mxu0
    %v1054 = vadd.f32 %v1025, %v1053
    %1055 = vmatmul.bf16.gmra.mxu0 %v716
    %v1056 = vpop.f32.mrf.mxu0
    %v1057 = vadd.f32 %v1028, %v1056
    %v1058 = vpop.f32.mrf.mxu0
    %v1059 = vadd.f32 %v1030, %v1058
    %1060 = vdwg.mxu0
    %1061 = vmatpush.bf16.msra.mxu0 %v941
    %1062 = vmatpush.bf16.msra.mxu0 %v940
    %1063 = vmatpush.bf16.msra.mxu0 %v939
    %1064 = vmatpush.bf16.msra.mxu0 %v938
    %1065 = vmatpush.bf16.msra.mxu0 %v937
    %1066 = vmatpush.bf16.msra.mxu0 %v936
    %1067 = vmatpush.bf16.msra.mxu0 %v935
    %1068 = vmatpush.bf16.msra.mxu0 %v934
    %1069 = vmatmul.bf16.gmra.mxu0 %v705
    %v1070 = vpop.f32.mrf.mxu0
    %v1071 = vadd.f32 %v1042, %v1070
    %v1072 = vpop.f32.mrf.mxu0
    %v1073 = vadd.f32 %v1044, %v1072
    %1074 = vmatmul.bf16.gmra.mxu0 %v709
    %v1075 = vpop.f32.mrf.mxu0
    %v1076 = vadd.f32 %v1047, %v1075
    %v1077 = vpop.f32.mrf.mxu0
    %v1078 = vadd.f32 %v1049, %v1077
    %1079 = vmatmul.bf16.gmra.mxu0 %v713
    %v1080 = vpop.f32.mrf.mxu0
    %v1081 = vadd.f32 %v1052, %v1080
    %v1082 = vpop.f32.mrf.mxu0
    %v1083 = vadd.f32 %v1054, %v1082
    %1084 = vmatmul.bf16.gmra.mxu0 %v717
    %v1085 = vpop.f32.mrf.mxu0
    %v1086 = vadd.f32 %v1057, %v1085
    %v1087 = vpop.f32.mrf.mxu0
    %v1088 = vadd.f32 %v1059, %v1087
    %1089 = vdwg.mxu0
    // Predicated region
    $region54: #{tpu_custom_call.1} parent=1 // pred_check
      %p1090 = pneg %p101
    $region55: #{tpu_custom_call.1} parent=1 // pred_check_branch
      %1092 = sbr.rel (%p1090) target = $region57
    $region56: #{tpu_custom_call.1} parent=1 // pred_region
      %v1093 = vld [vmem:[%s6] sm:$0x1]
      %v1095 = vperm.slane %v1093, 0
      %v1097 = vadd.f32 %v1071, %v1095
      %v1098 = vadd.f32 %v1073, %v1095
      %v1099 = vadd.f32 %v1076, %v1095
      %v1100 = vadd.f32 %v1078, %v1095
      %v1101 = vadd.f32 %v1081, %v1095
      %v1102 = vadd.f32 %v1083, %v1095
      %v1103 = vadd.f32 %v1086, %v1095
      %v1104 = vadd.f32 %v1088, %v1095
      %v1105 = vld [vmem:[#allocation3] sm:$0xff]
      %v1106 = vld [vmem:[#allocation3 + $0x8] sm:$0xff]
      %v1107 = vld [vmem:[#allocation3 + $0x10] sm:$0xff]
      %v1108 = vld [vmem:[#allocation3 + $0x18] sm:$0xff]
      %v1109 = vld [vmem:[#allocation3 + $0x20] sm:$0xff]
      %v1110 = vld [vmem:[#allocation3 + $0x28] sm:$0xff]
      %v1111 = vld [vmem:[#allocation3 + $0x30] sm:$0xff]
      %v1112 = vld [vmem:[#allocation3 + $0x38] sm:$0xff]
      %v1113 = vadd.f32 %v1097, %v1105
      %v1114 = vadd.f32 %v1098, %v1106
      %v1115 = vadd.f32 %v1099, %v1107
      %v1116 = vadd.f32 %v1100, %v1108
      %v1117 = vadd.f32 %v1101, %v1109
      %v1118 = vadd.f32 %v1102, %v1110
      %v1119 = vadd.f32 %v1103, %v1111
      %v1120 = vadd.f32 %v1104, %v1112
      %1121 = vst [vmem:[#allocation12] sm:$0xff] %v1113
      %1122 = vst [vmem:[#allocation12 + $0x8] sm:$0xff] %v1114
      %1123 = vst [vmem:[#allocation12 + $0x10] sm:$0xff] %v1115
      %1124 = vst [vmem:[#allocation12 + $0x18] sm:$0xff] %v1116
      %1125 = vst [vmem:[#allocation12 + $0x20] sm:$0xff] %v1117
      %1126 = vst [vmem:[#allocation12 + $0x28] sm:$0xff] %v1118
      %1127 = vst [vmem:[#allocation12 + $0x30] sm:$0xff] %v1119
      %1128 = vst [vmem:[#allocation12 + $0x38] sm:$0xff] %v1120
    $region57: #{tpu_custom_call.1} parent=1 // pred_fallthru
      _
    %p1129 = scmp.gt.s32.totalorder 0, 0
    // Predicated region
    $region58: #{tpu_custom_call.1} parent=1 // pred_check
      %p1130 = pneg %p1129
    $region59: #{tpu_custom_call.1} parent=1 // pred_check_branch
      %1132 = sbr.rel (%p1130) target = $region61
    $region60: #{tpu_custom_call.1} parent=1 // pred_region
      %v1133 = vld [vmem:[#allocation12] sm:$0xff]
      %v1134 = vld [vmem:[#allocation12 + $0x8] sm:$0xff]
      %v1135 = vld [vmem:[#allocation12 + $0x10] sm:$0xff]
      %v1136 = vld [vmem:[#allocation12 + $0x18] sm:$0xff]
      %v1137 = vld [vmem:[#allocation12 + $0x20] sm:$0xff]
      %v1138 = vld [vmem:[#allocation12 + $0x28] sm:$0xff]
      %v1139 = vld [vmem:[#allocation12 + $0x30] sm:$0xff]
      %v1140 = vld [vmem:[#allocation12 + $0x38] sm:$0xff]
      %v1141 = vadd.f32 %v1133, %v1071
      %v1142 = vadd.f32 %v1134, %v1073
      %v1143 = vadd.f32 %v1135, %v1076
      %v1144 = vadd.f32 %v1136, %v1078
      %v1145 = vadd.f32 %v1137, %v1081
      %v1146 = vadd.f32 %v1138, %v1083
      %v1147 = vadd.f32 %v1139, %v1086
      %v1148 = vadd.f32 %v1140, %v1088
      %1149 = vst [vmem:[#allocation12] sm:$0xff] %v1141
      %1150 = vst [vmem:[#allocation12 + $0x8] sm:$0xff] %v1142
      %1151 = vst [vmem:[#allocation12 + $0x10] sm:$0xff] %v1143
      %1152 = vst [vmem:[#allocation12 + $0x18] sm:$0xff] %v1144
      %1153 = vst [vmem:[#allocation12 + $0x20] sm:$0xff] %v1145
      %1154 = vst [vmem:[#allocation12 + $0x28] sm:$0xff] %v1146
      %1155 = vst [vmem:[#allocation12 + $0x30] sm:$0xff] %v1147
      %1156 = vst [vmem:[#allocation12 + $0x38] sm:$0xff] %v1148
    $region61: #{tpu_custom_call.1} parent=1 // pred_fallthru
      _
    // Predicated region
    $region62: #{tpu_custom_call.1} parent=1 // pred_check
      _
    $region63: #{tpu_custom_call.1} parent=1 // pred_check_branch
      %1158 = sbr.rel (0) target = $region65
    $region64: #{tpu_custom_call.1} parent=1 // pred_region
      %1160 = vsyncadd [#allocation5], 0
      %s1161 = sshll.u32 [#allocation12], 4
      %s1162 = int_to_ptr.vmem [resolvable:$true] %s1161
      %s1163 = sshll.u32 %s7, 4
      %s1164 = int_to_ptr.hbm [resolvable:$true] %s1163
      %1169 = dma.vmem_to_hbm [thread:$0]  %s1162, 1024, %s1164, [#allocation5], 128, 128, 8
    $region65: #{tpu_custom_call.1} parent=1 // pred_fallthru
      _
    // Predicated region
    $region66: #{tpu_custom_call.1} parent=1 // pred_check
      _
    $region67: #{tpu_custom_call.1} parent=1 // pred_check_branch
      %1171 = sbr.rel (0) target = $region69
    $region68: #{tpu_custom_call.1} parent=1 // pred_region
      %1173 = dma.done [#allocation5], 1024
    $region69: #{tpu_custom_call.1} parent=1 // pred_fallthru
      _
    %1174 = vsyncpa [#allocation4], 1
    %1175 = vsyncpa [#allocation7], 1
    %1176 = vsyncpa [#allocation10], 1
    %1177 = vsyncpa [#allocation5], 1

</llo_original>
